<compile_context>
chip_gen: v7x
topology: tpu7x:2x2x1
jax: 0.10.0
libtpu: 0.0.40
codegen_flags: <defaults>
</compile_context>

<pallas_src>
import functools
import math

import jax
import jax.numpy as jnp
from jax import lax
from jax.experimental import pallas as pl
from jax.experimental.pallas import tpu as pltpu


def _round_up(x, m):
    return ((x + m - 1) // m) * m


def _vmem_capacity_bytes():
    """Physical per-core VMEM (128 MiB on v5e/v6e, 64 MiB on v7x)."""
    try:
        cap = int(pltpu.get_tpu_info().vmem_capacity_bytes)
        if cap > 0:
            return cap
    except Exception:
        pass
    try:
        kind = jax.devices()[0].device_kind.lower()
        if "v5" in kind or "v6" in kind:
            return 128 * 1024 * 1024
    except Exception:
        pass
    return 64 * 1024 * 1024  # conservative (v7x-sized) fallback


def _vmem_budget_bytes():
    """Per-generation scoped-VMEM cap we are willing to request."""
    cap = _vmem_capacity_bytes()
    if cap <= 64 * 1024 * 1024:
        # v7x: 64 MiB physical -> leave headroom for compiler-internal scratch.
        return max(min(cap - 16 * 1024 * 1024, 48 * 1024 * 1024), 32 * 1024 * 1024)
    # v5e / v6e: 128 MiB physical.
    return min(cap - 24 * 1024 * 1024, 100 * 1024 * 1024)


def _gelu_f32(h, use_tanh):
    if use_tanh:
        # tanh-approx GELU: tanh runs on the EUP (its own VLIW slot), keeping the VALU
        # free under MXU work. Numerics differ slightly from exact erf-GELU.
        c = jnp.float32(math.sqrt(2.0 / math.pi))
        return 0.5 * h * (1.0 + jnp.tanh(c * (h + jnp.float32(0.044715) * h * h * h)))
    # Exact erf-GELU (matches torch.nn.functional.gelu default).
    return h * (0.5 * (lax.erf(h * jnp.float32(1.0 / math.sqrt(2.0))) + 1.0))


def _mlp_resident_kernel(x_ref, w1_ref, b1_ref, w2_ref, b2_ref, o_ref, *, use_tanh_gelu):
    # Whole mlp_dim in one pass. w1/w2/b1/b2 have constant index maps, so Pallas keeps
    # them resident in VMEM across all row tiles: no weight re-streaming, no accumulator.
    h = jnp.dot(x_ref[...], w1_ref[...], preferred_element_type=jnp.float32)
    h = h + b1_ref[...].astype(jnp.float32)
    h = _gelu_f32(h, use_tanh_gelu)
    y = jnp.dot(h.astype(x_ref.dtype), w2_ref[...], preferred_element_type=jnp.float32)
    o_ref[...] = (y + b2_ref[...].astype(jnp.float32)).astype(o_ref.dtype)


def _mlp_streaming_kernel(x_ref, w1_ref, b1_ref, w2_ref, b2_ref, o_ref, acc_ref, *, use_tanh_gelu):
    # Grid: (row tiles, mlp_dim tiles). Axis 1 is the fc2 reduction axis (last, "arbitrary").
    @pl.when(pl.program_id(1) == 0)
    def _():
        acc_ref[...] = jnp.zeros_like(acc_ref)

    # fc1 partial (this mlp_dim tile) in f32, bias then GELU.
    h = jnp.dot(x_ref[...], w1_ref[...], preferred_element_type=jnp.float32)
    h = h + b1_ref[...].astype(jnp.float32)
    h = _gelu_f32(h, use_tanh_gelu)

    # fc2 partial: cast activation back to the input dtype for the MXU, accumulate in f32.
    acc_ref[...] += jnp.dot(
        h.astype(x_ref.dtype), w2_ref[...], preferred_element_type=jnp.float32
    )

    @pl.when(pl.program_id(1) == pl.num_programs(1) - 1)
    def _():
        o_ref[...] = (acc_ref[...] + b2_ref[...].astype(jnp.float32)).astype(o_ref.dtype)


@functools.partial(
    jax.jit,
    static_argnames=("hidden", "mlp_p", "tn", "tm", "resident", "vmem_budget", "use_tanh_gelu"),
)
def _mlp_pallas(x, w1p, b1p, w2p, b2p, *, hidden, mlp_p, tn, tm, resident, vmem_budget,
                use_tanh_gelu):
    B, S, _ = x.shape
    M = B * S
    dtype = x.dtype
    bpe = jnp.dtype(dtype).itemsize
    sub = 16 if dtype == jnp.bfloat16 else 8  # sublane multiple

    # Row tile: large by default; bigger (512) when streaming weights so the
    # weight-streaming arithmetic intensity clears the v6e/v7x roofline.
    tm_req = tm if tm is not None else (256 if resident else 512)
    tm_eff = max(sub, _round_up(min(tm_req, M), sub))
    if resident and _round_up(M, tm_eff) // tm_eff < 2 and M > sub:
        # v7x megacore: give both TensorCores work. Only in the resident path, where
        # extra row tiles don't re-stream weights from HBM.
        tm_eff = _round_up(-(-M // 2), sub)
    M_p = _round_up(M, tm_eff)
    n_row = M_p // tm_eff

    x2 = x.reshape(M, hidden)
    if M_p != M:
        x2 = jnp.pad(x2, ((0, M_p - M), (0, 0)))  # skipped entirely when already aligned

    flops = 4 * M_p * hidden * mlp_p
    transcendentals = M_p * mlp_p

    if resident:
        # VMEM estimate: weights (x2 buffer allocation), double-buffered x/out tiles,
        # and the f32 fc1 intermediate (+ temps / dtype-cast copy).
        est = 2 * bpe * (hidden * mlp_p + mlp_p + mlp_p * hidden + hidden)
        est += 2 * bpe * (2 * tm_eff * hidden)
        est += 3 * tm_eff * mlp_p * 4
        vmem_limit = int(min(max(int(1.2 * est), 32 * 1024 * 1024), vmem_budget))
        bytes_accessed = bpe * (2 * M_p * hidden + 2 * hidden * mlp_p + mlp_p + hidden)

        out = pl.pallas_call(
            functools.partial(_mlp_resident_kernel, use_tanh_gelu=use_tanh_gelu),
            out_shape=jax.ShapeDtypeStruct((M_p, hidden), dtype),
            grid_spec=pltpu.PrefetchScalarGridSpec(
                num_scalar_prefetch=0,
                grid=(n_row,),
                in_specs=[
                    pl.BlockSpec((tm_eff, hidden), lambda i: (i, 0)),   # x
                    pl.BlockSpec((hidden, mlp_p), lambda i: (0, 0)),    # w1 (resident)
                    pl.BlockSpec((1, mlp_p), lambda i: (0, 0)),         # b1 (resident)
                    pl.BlockSpec((mlp_p, hidden), lambda i: (0, 0)),    # w2 (resident)
                    pl.BlockSpec((1, hidden), lambda i: (0, 0)),        # b2 (resident)
                ],
                out_specs=pl.BlockSpec((tm_eff, hidden), lambda i: (i, 0)),
            ),
            compiler_params=pltpu.CompilerParams(
                dimension_semantics=("parallel",),
                vmem_limit_bytes=vmem_limit,
            ),
            cost_estimate=pl.CostEstimate(
                flops=flops, transcendentals=transcendentals, bytes_accessed=bytes_accessed
            ),
        )(x2, w1p, b1p, w2p, b2p)
    else:
        n_red = mlp_p // tn
        # Double-buffered blocks + f32 accumulator + f32 fc1 intermediate (+ temps).
        est = 2 * bpe * (tm_eff * hidden + hidden * tn + tn + tn * hidden + hidden
                         + tm_eff * hidden)
        est += tm_eff * hidden * 4
        est += 3 * tm_eff * tn * 4
        vmem_limit = int(min(max(int(1.2 * est), 32 * 1024 * 1024), vmem_budget))
        bytes_accessed = bpe * (2 * M_p * hidden + n_row * 2 * hidden * mlp_p + mlp_p + hidden)

        out = pl.pallas_call(
            functools.partial(_mlp_streaming_kernel, use_tanh_gelu=use_tanh_gelu),
            out_shape=jax.ShapeDtypeStruct((M_p, hidden), dtype),
            grid_spec=pltpu.PrefetchScalarGridSpec(
                num_scalar_prefetch=0,
                grid=(n_row, n_red),
                in_specs=[
                    pl.BlockSpec((tm_eff, hidden), lambda i, n: (i, 0)),   # x
                    pl.BlockSpec((hidden, tn), lambda i, n: (0, n)),       # w1 tile
                    pl.BlockSpec((1, tn), lambda i, n: (0, n)),            # b1 tile
                    pl.BlockSpec((tn, hidden), lambda i, n: (n, 0)),       # w2 tile
                    pl.BlockSpec((1, hidden), lambda i, n: (0, 0)),        # b2 (resident)
                ],
                out_specs=pl.BlockSpec((tm_eff, hidden), lambda i, n: (i, 0)),
                scratch_shapes=[pltpu.VMEM((tm_eff, hidden), jnp.float32)],
            ),
            compiler_params=pltpu.CompilerParams(
                dimension_semantics=("parallel", "arbitrary"),
                vmem_limit_bytes=vmem_limit,
            ),
            cost_estimate=pl.CostEstimate(
                flops=flops, transcendentals=transcendentals, bytes_accessed=bytes_accessed
            ),
        )(x2, w1p, b1p, w2p, b2p)

    if M_p != M:
        out = out[:M]
    return out.reshape(B, S, hidden)


def make_mlp(w1, b1, w2, b2, *, tm=None, tn=512, residency=None, use_tanh_gelu=False):
    """Prepare an Mlp forward closure: x [B, S, hidden] -> [B, S, hidden].

    Weight padding (streaming path only) is done ONCE here, not per forward call.
    residency: None = auto (resident weights when they fit VMEM), True/False = force.
    """
    hidden, mlp_dim = w1.shape
    dtype = w1.dtype
    bpe = jnp.dtype(dtype).itemsize
    vmem_budget = _vmem_budget_bytes()

    # Weight-resident fast path decision: whole w1/w2 (+ biases, double-buffered row
    # tiles, and the f32 fc1 intermediate) must fit the per-generation VMEM budget.
    tm_nom = tm if tm is not None else 256
    resident_est = (
        2 * bpe * (2 * hidden * mlp_dim + mlp_dim + hidden)
        + 2 * bpe * (2 * tm_nom * hidden)
        + 3 * tm_nom * mlp_dim * 4
    )
    resident = (resident_est <= int(0.9 * vmem_budget)) if residency is None else bool(residency)

    if resident:
        # No padding at all: full-array blocks are always legal, and skipping the pad
        # avoids per-call HBM copies and MXU/DMA inflation for narrow models.
        mlp_p, tn_eff = mlp_dim, mlp_dim
        w1p, b1p, w2p, b2p = w1, b1, w2, b2
    else:
        tn_eff = _round_up(min(tn, _round_up(mlp_dim, 128)), 128)
        mlp_p = _round_up(mlp_dim, tn_eff)
        # Zero padding is exact: GELU(0)=0 and padded columns contribute zero to every
        # real output. Done once here (hoisted out of the per-call jit path).
        w1p = jnp.pad(w1, ((0, 0), (0, mlp_p - mlp_dim)))
        b1p = jnp.pad(b1, ((0, 0), (0, mlp_p - mlp_dim)))
        w2p = jnp.pad(w2, ((0, mlp_p - mlp_dim), (0, 0)))
        b2p = b2

    def forward(x):
        return _mlp_pallas(
            x, w1p, b1p, w2p, b2p,
            hidden=hidden, mlp_p=mlp_p, tn=tn_eff, tm=tm,
            resident=resident, vmem_budget=vmem_budget, use_tanh_gelu=use_tanh_gelu,
        )

    return forward


def init_params(key, hidden_size, mlp_dim, dtype=jnp.float32):
    """Xavier-uniform weights / std=1e-6 normal biases, mirroring Mlp._init_weights()."""
    k1, k2, k3, k4 = jax.random.split(key, 4)
    bound1 = math.sqrt(6.0 / (hidden_size + mlp_dim))
    bound2 = math.sqrt(6.0 / (mlp_dim + hidden_size))
    # Weights stored pre-transposed so y = x @ W + b.
    w1 = jax.random.uniform(k1, (hidden_size, mlp_dim), dtype, -bound1, bound1)
    w2 = jax.random.uniform(k2, (mlp_dim, hidden_size), dtype, -bound2, bound2)
    b1 = (jax.random.normal(k3, (1, mlp_dim)) * 1e-6).astype(dtype)
    b2 = (jax.random.normal(k4, (1, hidden_size)) * 1e-6).astype(dtype)
    return w1, b1, w2, b2


def mlp_reference(x, w1, b1, w2, b2):
    h = x @ w1 + b1[0]
    h = jax.nn.gelu(h, approximate=False)
    return h @ w2 + b2[0]


if __name__ == "__main__":
    key = jax.random.PRNGKey(0)
    kx, kp, kx2, kp2 = jax.random.split(key, 4)

    # Test 1: small config consistent with the module (hidden=32, mlp_dim=64).
    # Auto planning picks the weight-resident fast path.
    B, S, hidden_size, mlp_dim = 2, 8, 32, 64
    x = jax.random.normal(kx, (B, S, hidden_size), jnp.float32)
    w1, b1, w2, b2 = init_params(kp, hidden_size, mlp_dim)
    fwd = make_mlp(w1, b1, w2, b2)
    out = jax.block_until_ready(fwd(x))
    ref = mlp_reference(x.reshape(-1, hidden_size), w1, b1, w2, b2).reshape(B, S, hidden_size)
    assert out.shape == (B, S, hidden_size)
    assert jnp.allclose(out, ref, atol=2e-5, rtol=2e-5), float(jnp.max(jnp.abs(out - ref)))

    # Test 2: force the streaming (mlp_dim-tiled reduction) path so both kernels compile
    # and the accumulator init/finalize logic is exercised (2 reduction steps).
    B2, S2, h2, m2 = 2, 24, 64, 256
    x2 = jax.random.normal(kx2, (B2, S2, h2), jnp.float32)
    w1b, b1b, w2b, b2b = init_params(kp2, h2, m2)
    fwd_stream = make_mlp(w1b, b1b, w2b, b2b, tn=128, residency=False)
    out2 = jax.block_until_ready(fwd_stream(x2))
    ref2 = mlp_reference(x2.reshape(-1, h2), w1b, b1b, w2b, b2b).reshape(B2, S2, h2)
    assert jnp.allclose(out2, ref2, atol=2e-5, rtol=2e-5), float(jnp.max(jnp.abs(out2 - ref2)))

    print("KERNEL_OK")
</pallas_src>

<mosaic_0001>
module attributes {stable_mosaic.version = 11 : i64} {
  func.func @_mlp_resident_kernel(%arg0: i32, %arg1: memref<8x32xf32, #tpu.memory_space<vmem>>, %arg2: memref<32x64xf32, #tpu.memory_space<vmem>>, %arg3: memref<1x64xf32, #tpu.memory_space<vmem>>, %arg4: memref<64x32xf32, #tpu.memory_space<vmem>>, %arg5: memref<1x32xf32, #tpu.memory_space<vmem>>, %arg6: memref<8x32xf32, #tpu.memory_space<vmem>>) attributes {dimension_semantics = [#tpu.dimension_semantics<parallel>], iteration_bounds = array<i64: 2>, scalar_prefetch = 0 : i64, scratch_operands = 0 : i64, tpu.core_type = #tpu.core_type<tc>, window_params = [{transform_indices = @transform_0, window_bounds = array<i64: 8, 32>}, {pipeline_mode = #tpu.pipeline_mode<synchronous>, transform_indices = @transform_1, window_bounds = array<i64: 32, 64>}, {pipeline_mode = #tpu.pipeline_mode<synchronous>, transform_indices = @transform_2, window_bounds = array<i64: 1, 64>}, {pipeline_mode = #tpu.pipeline_mode<synchronous>, transform_indices = @transform_3, window_bounds = array<i64: 64, 32>}, {pipeline_mode = #tpu.pipeline_mode<synchronous>, transform_indices = @transform_4, window_bounds = array<i64: 1, 32>}, {transform_indices = @transform_5, window_bounds = array<i64: 8, 32>}]} {
    %c0 = arith.constant 0 : index
    %c0_0 = arith.constant 0 : index
    %0 = vector.load %arg1[%c0, %c0_0] : memref<8x32xf32, #tpu.memory_space<vmem>>, vector<8x32xf32>
    %c0_1 = arith.constant 0 : index
    %c0_2 = arith.constant 0 : index
    %1 = vector.load %arg2[%c0_1, %c0_2] : memref<32x64xf32, #tpu.memory_space<vmem>>, vector<32x64xf32>
    %cst = arith.constant dense<0.000000e+00> : vector<8x64xf32>
    %2 = tpu.matmul %0, %1, %cst {dimension_numbers = #tpu.dot_dimension_numbers<[1], [0], [0], [1], [0, 0, 1, 1], [], []>} : vector<8x32xf32>, vector<32x64xf32>, vector<8x64xf32> -> vector<8x64xf32>
    %c0_3 = arith.constant 0 : index
    %c0_4 = arith.constant 0 : index
    %3 = vector.load %arg3[%c0_3, %c0_4] : memref<1x64xf32, #tpu.memory_space<vmem>>, vector<1x64xf32>
    %4 = vector.broadcast %3 : vector<1x64xf32> to vector<8x64xf32>
    %5 = arith.addf %2, %4 : vector<8x64xf32>
    %cst_5 = arith.constant 0.707106769 : f32
    %6 = vector.broadcast %cst_5 : f32 to vector<8x64xf32>
    %7 = arith.mulf %5, %6 : vector<8x64xf32>
    %8 = math.erf %7 : vector<8x64xf32>
    %cst_6 = arith.constant 1.000000e+00 : f32
    %9 = vector.broadcast %cst_6 : f32 to vector<8x64xf32>
    %10 = arith.addf %8, %9 : vector<8x64xf32>
    %cst_7 = arith.constant 5.000000e-01 : f32
    %11 = vector.broadcast %cst_7 : f32 to vector<8x64xf32>
    %12 = arith.mulf %11, %10 : vector<8x64xf32>
    %13 = arith.mulf %5, %12 : vector<8x64xf32>
    %c0_8 = arith.constant 0 : index
    %c0_9 = arith.constant 0 : index
    %14 = vector.load %arg4[%c0_8, %c0_9] : memref<64x32xf32, #tpu.memory_space<vmem>>, vector<64x32xf32>
    %cst_10 = arith.constant dense<0.000000e+00> : vector<8x32xf32>
    %15 = tpu.matmul %13, %14, %cst_10 {dimension_numbers = #tpu.dot_dimension_numbers<[1], [0], [0], [1], [0, 0, 1, 1], [], []>} : vector<8x64xf32>, vector<64x32xf32>, vector<8x32xf32> -> vector<8x32xf32>
    %c0_11 = arith.constant 0 : index
    %c0_12 = arith.constant 0 : index
    %16 = vector.load %arg5[%c0_11, %c0_12] : memref<1x32xf32, #tpu.memory_space<vmem>>, vector<1x32xf32>
    %17 = vector.broadcast %16 : vector<1x32xf32> to vector<8x32xf32>
    %18 = arith.addf %15, %17 : vector<8x32xf32>
    %c0_13 = arith.constant 0 : index
    %c0_14 = arith.constant 0 : index
    %19 = vector.load %arg6[%c0_13, %c0_14] : memref<8x32xf32, #tpu.memory_space<vmem>>, vector<8x32xf32>
    tpu.vector_store %arg6[%c0_13, %c0_14], %18 {strides = array<i32>} : memref<8x32xf32, #tpu.memory_space<vmem>>, vector<8x32xf32>,
    return
  }
  func.func @transform_0(%arg0: i32) -> (i32, i32) {
    %c0_i32 = arith.constant 0 : i32
    %c0_i32_0 = arith.constant 0 : i32
    return %arg0, %c0_i32 : i32, i32
  }
  func.func @transform_1(%arg0: i32) -> (i32, i32) {
    %c0_i32 = arith.constant 0 : i32
    %c0_i32_0 = arith.constant 0 : i32
    %c0_i32_1 = arith.constant 0 : i32
    return %c0_i32, %c0_i32_0 : i32, i32
  }
  func.func @transform_2(%arg0: i32) -> (i32, i32) {
    %c0_i32 = arith.constant 0 : i32
    %c0_i32_0 = arith.constant 0 : i32
    %c0_i32_1 = arith.constant 0 : i32
    return %c0_i32, %c0_i32_0 : i32, i32
  }
  func.func @transform_3(%arg0: i32) -> (i32, i32) {
    %c0_i32 = arith.constant 0 : i32
    %c0_i32_0 = arith.constant 0 : i32
    %c0_i32_1 = arith.constant 0 : i32
    return %c0_i32, %c0_i32_0 : i32, i32
  }
  func.func @transform_4(%arg0: i32) -> (i32, i32) {
    %c0_i32 = arith.constant 0 : i32
    %c0_i32_0 = arith.constant 0 : i32
    %c0_i32_1 = arith.constant 0 : i32
    return %c0_i32, %c0_i32_0 : i32, i32
  }
  func.func @transform_5(%arg0: i32) -> (i32, i32) {
    %c0_i32 = arith.constant 0 : i32
    %c0_i32_0 = arith.constant 0 : i32
    return %arg0, %c0_i32 : i32, i32
  }
}

</mosaic_0001>

<llo_original>
// kernel: _mlp_pallas.1
$region0: #{_mlp_pallas.1}
  #allocation0 [shape = 'u32[]', space=smem, size = 0x4, offset = 0x4, fixed_abs, tag = 'smem constant byte address 0x4 - core index']
  #allocation1 [shape = 'u32[144,128]{1,0:T(1,128)}', space=vmem, size = 0x12000, scoped, tag = 'internal scratch']
  %s0 = inlined_call_operand.vmem [shape: f32[16,32], index: 0, kind: input, shape index: {}]
  %s1 = inlined_call_operand.vmem [shape: f32[32,64], index: 1, kind: input, shape index: {}]
  %s2 = inlined_call_operand.vmem [shape: f32[1,64], index: 2, kind: input, shape index: {}]
  %s3 = inlined_call_operand.vmem [shape: f32[64,32], index: 3, kind: input, shape index: {}]
  %s4 = inlined_call_operand.vmem [shape: f32[1,32], index: 4, kind: input, shape index: {}]
  %s5 = inlined_call_operand.hbm [shape: f32[16,32], index: 5, kind: output, shape index: {}]
  %s6 = sld [smem:[#allocation0]]
  $region53: #{_mlp_pallas.1} parent=0
    _
  %s8 = ssub.s32 1, %s6
  %s9 = scalar_select 0, %s8, %s6
  $region1: #{_mlp_pallas.1} parent=0
    #allocation2 [shape = 'u8[8192]{0}', space=vmem, size = 0x2000, scoped, tag = 'output window, operand 0']
    #allocation3 [shape = 's32[2]{0}', space=sflag, size = 0x8, scoped, tag = 'scoped memory for _mlp_pallas.1']
    %10 = vsyncpa [#allocation3], 0
    %s11 = scalar_lea.sflag [#allocation3], 1
    %12 = vsyncpa %s11, 0
    loop: start=0, step=1, limit=4
    $region2: #{_mlp_pallas.1} parent=1 // loop_pre_header
      _
    $region3: #{_mlp_pallas.1} parent=1 // loop_header
      %s14 = sphi 0, %s18
      %p15 = scmp.ge.s32.totalorder %s14, 4
      %s24 = sphi 0, %s26
      %s27 = sphi 0, %s24
      %s28 = sphi 0, %s27
      %s44 = sphi 0, %s28
      %s48 = sphi 0, %s48
      %s50 = sphi 0, %s48
      %s51 = sphi 0, %s50
      %s65 = sphi 0, %s51
      %s69 = sphi 0, %s69
      %s71 = sphi 0, %s69
      %s72 = sphi 0, %s71
      %s86 = sphi 0, %s72
      %s90 = sphi 0, %s90
      %s92 = sphi 0, %s90
      %s93 = sphi 0, %s92
      %s107 = sphi 0, %s93
      %s111 = sphi 0, %s111
      %s113 = sphi 0, %s111
      %s114 = sphi 0, %s113
      %s128 = sphi 0, %s114
      %s134 = sphi 0, %s136
      %s137 = sphi 0, %s134
      %s138 = sphi 0, %s137
      %s154 = sphi 0, %s138
    $region4: #{_mlp_pallas.1} parent=1 // loop_header_branch
      %17 = sbr.rel (%p15) target = $region8
    $region5: #{_mlp_pallas.1} parent=1 // loop_body
      %s19 = ssub.s32 %s14, 1
      %s20 = ssub.s32 %s14, 2
      %s21 = sadd.s32 %s14, 1
      %s22 = ssub.s32 %s14, %s21
      %p23 = scmp.eq.s32.totalorder %s22, 0
      %s25 = sadd.s32 %s24, 1
      %s26 = scalar_select %p23, %s24, %s25
      %p29 = pneg %p23
      %p30 = scmp.eq.s32.totalorder %s14, 1
      %p31 = por %p29, %p30
      %p32 = scmp.ne.s32.totalorder %s24, %s27
      %p33 = scmp.eq.s32.totalorder %s14, 0
      %p34 = por %p32, %p33
      %p35 = scmp.ne.s32.totalorder %s24, %s27
      %p36 = scmp.eq.s32.totalorder %s19, 1
      %p37 = por %p35, %p36
      %p38 = scmp.ne.s32.totalorder %s27, %s28
      %p39 = scmp.eq.s32.totalorder %s19, 0
      %p40 = por %p38, %p39
      %p41 = scmp.ne.s32.totalorder %s27, %s28
      %p42 = scmp.eq.s32.totalorder %s20, 1
      %p43 = por %p41, %p42
      %p45 = scmp.ne.s32.totalorder %s28, %s44
      %p46 = scmp.eq.s32.totalorder %s20, 0
      %p47 = por %p45, %p46
      %s49 = sadd.s32 %s48, 1
      %p52 = scmp.eq.s32.totalorder %s14, 1
      %p53 = scmp.ne.s32.totalorder %s48, %s50
      %p54 = scmp.eq.s32.totalorder %s14, 0
      %p55 = por %p53, %p54
      %p56 = scmp.ne.s32.totalorder %s48, %s50
      %p57 = scmp.eq.s32.totalorder %s19, 1
      %p58 = por %p56, %p57
      %p59 = scmp.ne.s32.totalorder %s50, %s51
      %p60 = scmp.eq.s32.totalorder %s19, 0
      %p61 = por %p59, %p60
      %p62 = scmp.ne.s32.totalorder %s50, %s51
      %p63 = scmp.eq.s32.totalorder %s20, 1
      %p64 = por %p62, %p63
      %p66 = scmp.ne.s32.totalorder %s51, %s65
      %p67 = scmp.eq.s32.totalorder %s20, 0
      %p68 = por %p66, %p67
      %s70 = sadd.s32 %s69, 1
      %p73 = scmp.eq.s32.totalorder %s14, 1
      %p74 = scmp.ne.s32.totalorder %s69, %s71
      %p75 = scmp.eq.s32.totalorder %s14, 0
      %p76 = por %p74, %p75
      %p77 = scmp.ne.s32.totalorder %s69, %s71
      %p78 = scmp.eq.s32.totalorder %s19, 1
      %p79 = por %p77, %p78
      %p80 = scmp.ne.s32.totalorder %s71, %s72
      %p81 = scmp.eq.s32.totalorder %s19, 0
      %p82 = por %p80, %p81
      %p83 = scmp.ne.s32.totalorder %s71, %s72
      %p84 = scmp.eq.s32.totalorder %s20, 1
      %p85 = por %p83, %p84
      %p87 = scmp.ne.s32.totalorder %s72, %s86
      %p88 = scmp.eq.s32.totalorder %s20, 0
      %p89 = por %p87, %p88
      %s91 = sadd.s32 %s90, 1
      %p94 = scmp.eq.s32.totalorder %s14, 1
      %p95 = scmp.ne.s32.totalorder %s90, %s92
      %p96 = scmp.eq.s32.totalorder %s14, 0
      %p97 = por %p95, %p96
      %p98 = scmp.ne.s32.totalorder %s90, %s92
      %p99 = scmp.eq.s32.totalorder %s19, 1
      %p100 = por %p98, %p99
      %p101 = scmp.ne.s32.totalorder %s92, %s93
      %p102 = scmp.eq.s32.totalorder %s19, 0
      %p103 = por %p101, %p102
      %p104 = scmp.ne.s32.totalorder %s92, %s93
      %p105 = scmp.eq.s32.totalorder %s20, 1
      %p106 = por %p104, %p105
      %p108 = scmp.ne.s32.totalorder %s93, %s107
      %p109 = scmp.eq.s32.totalorder %s20, 0
      %p110 = por %p108, %p109
      %s112 = sadd.s32 %s111, 1
      %p115 = scmp.eq.s32.totalorder %s14, 1
      %p116 = scmp.ne.s32.totalorder %s111, %s113
      %p117 = scmp.eq.s32.totalorder %s14, 0
      %p118 = por %p116, %p117
      %p119 = scmp.ne.s32.totalorder %s111, %s113
      %p120 = scmp.eq.s32.totalorder %s19, 1
      %p121 = por %p119, %p120
      %p122 = scmp.ne.s32.totalorder %s113, %s114
      %p123 = scmp.eq.s32.totalorder %s19, 0
      %p124 = por %p122, %p123
      %p125 = scmp.ne.s32.totalorder %s113, %s114
      %p126 = scmp.eq.s32.totalorder %s20, 1
      %p127 = por %p125, %p126
      %p129 = scmp.ne.s32.totalorder %s114, %s128
      %p130 = scmp.eq.s32.totalorder %s20, 0
      %p131 = por %p129, %p130
      %s132 = ssub.s32 %s14, %s21
      %p133 = scmp.eq.s32.totalorder %s132, 0
      %s135 = sadd.s32 %s134, 1
      %s136 = scalar_select %p133, %s134, %s135
      %p139 = pneg %p133
      %p140 = scmp.eq.s32.totalorder %s14, 1
      %p141 = por %p139, %p140
      %p142 = scmp.ne.s32.totalorder %s134, %s137
      %p143 = scmp.eq.s32.totalorder %s14, 0
      %p144 = por %p142, %p143
      %p145 = scmp.ne.s32.totalorder %s134, %s137
      %p146 = scmp.eq.s32.totalorder %s19, 1
      %p147 = por %p145, %p146
      %p148 = scmp.ne.s32.totalorder %s137, %s138
      %p149 = scmp.eq.s32.totalorder %s19, 0
      %p150 = por %p148, %p149
      %p151 = scmp.ne.s32.totalorder %s137, %s138
      %p152 = scmp.eq.s32.totalorder %s20, 1
      %p153 = por %p151, %p152
      %p155 = scmp.ne.s32.totalorder %s138, %s154
      %p156 = scmp.eq.s32.totalorder %s20, 0
      %p157 = por %p155, %p156
      %p158 = scmp.le.s32.totalorder 1, %s14
      %p159 = scmp.lt.s32.totalorder %s14, 3
      %p160 = pnand %p158, %p159
      %p161 = pneg %p160
      // Predicated region
      $region9: #{_mlp_pallas.1} parent=5 // pred_check
        _
      $region10: #{_mlp_pallas.1} parent=5 // pred_check_branch
        %163 = sbr.rel (%p160) target = $region12
      $region11: #{_mlp_pallas.1} parent=5 // pred_region
        %s164 = ssub.s32 %s14, 1
        // Predicated region
        $region13: #{_mlp_pallas.1} parent=11 // pred_check
          %p165 = pneg %p61
        $region14: #{_mlp_pallas.1} parent=11 // pred_check_branch
          %167 = sbr.rel (%p165) target = $region16
        $region15: #{_mlp_pallas.1} parent=11 // pred_region
          _
        $region16: #{_mlp_pallas.1} parent=11 // pred_fallthru
          _
        // Predicated region
        $region17: #{_mlp_pallas.1} parent=11 // pred_check
          %p168 = pneg %p82
        $region18: #{_mlp_pallas.1} parent=11 // pred_check_branch
          %170 = sbr.rel (%p168) target = $region20
        $region19: #{_mlp_pallas.1} parent=11 // pred_region
          _
        $region20: #{_mlp_pallas.1} parent=11 // pred_fallthru
          _
        // Predicated region
        $region21: #{_mlp_pallas.1} parent=11 // pred_check
          %p171 = pneg %p103
        $region22: #{_mlp_pallas.1} parent=11 // pred_check_branch
          %173 = sbr.rel (%p171) target = $region24
        $region23: #{_mlp_pallas.1} parent=11 // pred_region
          _
        $region24: #{_mlp_pallas.1} parent=11 // pred_fallthru
          _
        // Predicated region
        $region25: #{_mlp_pallas.1} parent=11 // pred_check
          %p174 = pneg %p124
        $region26: #{_mlp_pallas.1} parent=11 // pred_check_branch
          %176 = sbr.rel (%p174) target = $region28
        $region27: #{_mlp_pallas.1} parent=11 // pred_region
          _
        $region28: #{_mlp_pallas.1} parent=11 // pred_fallthru
          _
      $region12: #{_mlp_pallas.1} parent=5 // pred_fallthru
        _
      %p177 = scmp.lt.s32.totalorder %s14, 2
      // Predicated region
      $region29: #{_mlp_pallas.1} parent=5 // pred_check
        %p178 = pneg %p177
      $region30: #{_mlp_pallas.1} parent=5 // pred_check_branch
        %180 = sbr.rel (%p178) target = $region32
      $region31: #{_mlp_pallas.1} parent=5 // pred_region
        // Predicated region
        $region33: #{_mlp_pallas.1} parent=31 // pred_check
          %p181 = pneg %p34
        $region34: #{_mlp_pallas.1} parent=31 // pred_check_branch
          %183 = sbr.rel (%p181) target = $region36
        $region35: #{_mlp_pallas.1} parent=31 // pred_region
          %p184 = scmp.lt.s32.totalorder %s14, 1
          %s185 = scalar_select %p184, %s14, 1
          %s186 = smul.addr %s185, 8
          %s187 = scalar_lea.vmem %s0, %s186
        $region36: #{_mlp_pallas.1} parent=31 // pred_fallthru
          _
      $region32: #{_mlp_pallas.1} parent=5 // pred_fallthru
        _
      %p188 = scmp.le.s32.totalorder 1, %s14
      %p189 = scmp.lt.s32.totalorder %s14, 3
      %p190 = pnand %p188, %p189
      %p191 = pneg %p190
      // Predicated region
      $region37: #{_mlp_pallas.1} parent=5 // pred_check
        _
      $region38: #{_mlp_pallas.1} parent=5 // pred_check_branch
        %193 = sbr.rel (%p190) target = $region40
      $region39: #{_mlp_pallas.1} parent=5 // pred_region
        %s194 = ssub.s32 %s14, 1
        %p195 = scmp.lt.s32.totalorder %s19, 1
        %s196 = scalar_select %p195, %s19, 1
        %s197 = smul.addr %s196, 8
        %s198 = scalar_lea.vmem %s0, %s197
        %p199 = pneg %p40
        %p200 = pneg %p37
        %p201 = pneg %p61
        %p202 = pneg %p58
        %p203 = pneg %p82
        %p204 = pneg %p79
        %p205 = pneg %p103
        %p206 = pneg %p100
        %p207 = pneg %p124
        %p208 = pneg %p121
        %p209 = pneg %p150
        %p210 = pneg %p147
        %s211 = sand.u32 %s137, 1
        %s212 = scalar_lea.sflag [#allocation3], %s211
        %s213 = sand.u32 %s137, 1
        %s214 = smul.addr %s213, 8
        %s215 = scalar_lea.vmem [#allocation2], %s214
        %p216 = scmp.lt.s32.totalorder %s19, 1
        %s217 = scalar_select %p216, %s19, 1
        %s218 = smul.addr %s217, 8
        %s219 = scalar_lea.vmem %s0, %s218
        %v220 = vld [vmem:[%s219] sm:$0xff]
        %v221 = vld [vmem:[%s1] sm:$0xff]
        %v222 = vld [vmem:[%s1 + $0x8] sm:$0xff]
        %v223 = vld [vmem:[%s1 + $0x10] sm:$0xff]
        %v224 = vld [vmem:[%s1 + $0x18] sm:$0xff]
        %v225 = vld [vmem:[%s2] sm:$0x1]
        %v227 = vlaneseq
        %v228 = vshrl.u32 %v227, 7
        %v229 = vsub.s32 0, %v228
        %v230 = vrot.slane %v225, %v229
        %vm232 = vcmask 261120
        %v234 = vsel %vm232, %v220, 0
        %236 = vmatprep.subr.mxu0 0.0
        %237 = vmatpush1.msra.mxu0 %v221
        %238 = vmatprep.subr.mxu0 0.0
        %239 = vmatpush1.msra.mxu0 %v222
        %240 = vmatprep.subr.mxu0 0.0
        %241 = vmatpush1.msra.mxu0 %v223
        %242 = vmatprep.subr.mxu0 0.0
        %243 = vmatpush1.msra.mxu0 %v224
        %244 = vmatprep.subr.mxu0 0.0
        %245 = vmatpush1.msra.mxu0 0.0
        %246 = vmatprep.subr.mxu0 0.0
        %247 = vmatpush1.msra.mxu0 0.0
        %248 = vmatprep.subr.mxu0 0.0
        %249 = vmatpush1.msra.mxu0 0.0
        %250 = vmatprep.subr.mxu0 0.0
        %251 = vmatpush1.msra.mxu0 0.0
        %252 = vmatprep.subr.mxu0 0.0
        %253 = vmatpush1.msra.mxu0 0.0
        %254 = vmatprep.subr.mxu0 0.0
        %255 = vmatpush1.msra.mxu0 0.0
        %256 = vmatprep.subr.mxu0 0.0
        %257 = vmatpush1.msra.mxu0 0.0
        %258 = vmatprep.subr.mxu0 0.0
        %259 = vmatpush1.msra.mxu0 0.0
        %260 = vmatprep.subr.mxu0 0.0
        %261 = vmatpush1.msra.mxu0 0.0
        %262 = vmatprep.subr.mxu0 0.0
        %263 = vmatpush1.msra.mxu0 0.0
        %264 = vmatprep.subr.mxu0 0.0
        %265 = vmatpush1.msra.mxu0 0.0
        %266 = vmatprep.subr.mxu0 0.0
        %267 = vmatpush1.msra.mxu0 0.0
        %268 = vmatprep.subr.mxu0 0.0
        %269 = vmatpush1.msra.mxu0 0.0
        %270 = vmatprep.subr.mxu0 0.0
        %271 = vmatpush1.msra.mxu0 0.0
        %272 = vmatprep.subr.mxu0 0.0
        %273 = vmatpush1.msra.mxu0 0.0
        %274 = vmatprep.subr.mxu0 0.0
        %275 = vmatpush1.msra.mxu0 0.0
        %276 = vmatprep.subr.mxu0 0.0
        %277 = vmatpush1.msra.mxu0 0.0
        %278 = vmatprep.subr.mxu0 0.0
        %279 = vmatpush1.msra.mxu0 0.0
        %280 = vmatprep.subr.mxu0 0.0
        %281 = vmatpush1.msra.mxu0 0.0
        %282 = vmatprep.subr.mxu0 0.0
        %283 = vmatpush1.msra.mxu0 0.0
        %284 = vmatprep.subr.mxu0 0.0
        %285 = vmatpush1.msra.mxu0 0.0
        %286 = vmatprep.subr.mxu0 0.0
        %287 = vmatpush1.msra.mxu0 0.0
        %288 = vmatprep.subr.mxu0 0.0
        %289 = vmatpush1.msra.mxu0 0.0
        %290 = vmatprep.subr.mxu0 0.0
        %291 = vmatpush1.msra.mxu0 0.0
        %292 = vmatprep.subr.mxu0 0.0
        %293 = vmatpush1.msra.mxu0 0.0
        %294 = vmatprep.subr.mxu0 0.0
        %295 = vmatpush1.msra.mxu0 0.0
        %296 = vmatprep.subr.mxu0 0.0
        %297 = vmatpush1.msra.mxu0 0.0
        %298 = vmatprep.subr.mxu0 0.0
        %299 = vmatpush1.msra.mxu0 0.0
        %300 = vmatprep.mubr.f32.mxu0 0.0
        %301 = vmatmul.mubr.f32.gmra.mrb[0].mxu0 %v234
        %v302 = vpop.f32.mrb[0].mxu0
        %v303 = vadd.f32 %v230, %v302
        %v304 = vpop.f32.mrb[0].mxu0
        %305 = vdwg.mxu0
        %v306 = vmul.f32 %v303, 0.70710677
        %v307 = verf.f32.pop %v306
        %v308 = vadd.f32 %v307, 1.0
        %v309 = vmul.f32 %v308, 0.5
        %v310 = vmul.f32 %v303, %v309
        %v311 = vld [vmem:[%s3] sm:$0xff]
        %v312 = vld [vmem:[%s3 + $0x8] sm:$0xff]
        %v313 = vld [vmem:[%s3 + $0x10] sm:$0xff]
        %v314 = vld [vmem:[%s3 + $0x18] sm:$0xff]
        %v315 = vld [vmem:[%s3 + $0x20] sm:$0xff]
        %v316 = vld [vmem:[%s3 + $0x28] sm:$0xff]
        %v317 = vld [vmem:[%s3 + $0x30] sm:$0xff]
        %v318 = vld [vmem:[%s3 + $0x38] sm:$0xff]
        %v319 = vld [vmem:[%s4] sm:$0x1]
        %v321 = vlaneseq
        %v322 = vshrl.u32 %v321, 7
        %v323 = vsub.s32 0, %v322
        %v324 = vrot.slane %v319, %v323
        %vm326 = vcmask 523264
        %v328 = vsel %vm326, %v310, 0
        %330 = vmatprep.subr.mxu0 0.0
        %331 = vmatpush1.msra.mxu0 %v311
        %332 = vmatprep.subr.mxu0 0.0
        %333 = vmatpush1.msra.mxu0 %v312
        %334 = vmatprep.subr.mxu0 0.0
        %335 = vmatpush1.msra.mxu0 %v313
        %336 = vmatprep.subr.mxu0 0.0
        %337 = vmatpush1.msra.mxu0 %v314
        %338 = vmatprep.subr.mxu0 0.0
        %339 = vmatpush1.msra.mxu0 %v315
        %340 = vmatprep.subr.mxu0 0.0
        %341 = vmatpush1.msra.mxu0 %v316
        %342 = vmatprep.subr.mxu0 0.0
        %343 = vmatpush1.msra.mxu0 %v317
        %344 = vmatprep.subr.mxu0 0.0
        %345 = vmatpush1.msra.mxu0 %v318
        %346 = vmatprep.subr.mxu0 0.0
        %347 = vmatpush1.msra.mxu0 0.0
        %348 = vmatprep.subr.mxu0 0.0
        %349 = vmatpush1.msra.mxu0 0.0
        %350 = vmatprep.subr.mxu0 0.0
        %351 = vmatpush1.msra.mxu0 0.0
        %352 = vmatprep.subr.mxu0 0.0
        %353 = vmatpush1.msra.mxu0 0.0
        %354 = vmatprep.subr.mxu0 0.0
        %355 = vmatpush1.msra.mxu0 0.0
        %356 = vmatprep.subr.mxu0 0.0
        %357 = vmatpush1.msra.mxu0 0.0
        %358 = vmatprep.subr.mxu0 0.0
        %359 = vmatpush1.msra.mxu0 0.0
        %360 = vmatprep.subr.mxu0 0.0
        %361 = vmatpush1.msra.mxu0 0.0
        %362 = vmatprep.subr.mxu0 0.0
        %363 = vmatpush1.msra.mxu0 0.0
        %364 = vmatprep.subr.mxu0 0.0
        %365 = vmatpush1.msra.mxu0 0.0
        %366 = vmatprep.subr.mxu0 0.0
        %367 = vmatpush1.msra.mxu0 0.0
        %368 = vmatprep.subr.mxu0 0.0
        %369 = vmatpush1.msra.mxu0 0.0
        %370 = vmatprep.subr.mxu0 0.0
        %371 = vmatpush1.msra.mxu0 0.0
        %372 = vmatprep.subr.mxu0 0.0
        %373 = vmatpush1.msra.mxu0 0.0
        %374 = vmatprep.subr.mxu0 0.0
        %375 = vmatpush1.msra.mxu0 0.0
        %376 = vmatprep.subr.mxu0 0.0
        %377 = vmatpush1.msra.mxu0 0.0
        %378 = vmatprep.subr.mxu0 0.0
        %379 = vmatpush1.msra.mxu0 0.0
        %380 = vmatprep.subr.mxu0 0.0
        %381 = vmatpush1.msra.mxu0 0.0
        %382 = vmatprep.subr.mxu0 0.0
        %383 = vmatpush1.msra.mxu0 0.0
        %384 = vmatprep.subr.mxu0 0.0
        %385 = vmatpush1.msra.mxu0 0.0
        %386 = vmatprep.subr.mxu0 0.0
        %387 = vmatpush1.msra.mxu0 0.0
        %388 = vmatprep.subr.mxu0 0.0
        %389 = vmatpush1.msra.mxu0 0.0
        %390 = vmatprep.subr.mxu0 0.0
        %391 = vmatpush1.msra.mxu0 0.0
        %392 = vmatprep.subr.mxu0 0.0
        %393 = vmatpush1.msra.mxu0 0.0
        %394 = vmatprep.mubr.f32.mxu0 0.0
        %395 = vmatmul.mubr.f32.gmra.mrb[0].mxu0 %v328
        %v396 = vpop.f32.mrb[0].mxu0
        %v397 = vadd.f32 %v324, %v396
        %v398 = vpop.f32.mrb[0].mxu0
        %399 = vdwg.mxu0
        %400 = vst.msk [vmem:[%s215] sm:$0xff] %vm232, %v397
        %s401 = sand.u32 %s137, 1
        %s402 = scalar_lea.sflag [#allocation3], %s401
        %s403 = sand.u32 %s137, 1
        %s404 = smul.addr %s403, 8
        %s405 = scalar_lea.vmem [#allocation2], %s404
        // Predicated region
        $region41: #{_mlp_pallas.1} parent=39 // pred_check
          %p406 = pneg %p147
        $region42: #{_mlp_pallas.1} parent=39 // pred_check_branch
          %408 = sbr.rel (%p406) target = $region44
        $region43: #{_mlp_pallas.1} parent=39 // pred_region
          %s410 = ssub.s32 128, 128
          %411 = vsyncadd %s402, %s410
          %s412 = smul.addr %s19, 128
          %s413 = scalar_lea.hbm %s5, %s412
          %s415 = sshll.u32 %s405, 4
          %s416 = int_to_ptr.vmem [resolvable:$true] %s415
          %418 = dma.vmem_to_hbm [thread:$0]  %s416, 128, %s413, %s402
        $region44: #{_mlp_pallas.1} parent=39 // pred_fallthru
          _
      $region40: #{_mlp_pallas.1} parent=5 // pred_fallthru
        _
      %p419 = scmp.le.s32.totalorder 2, %s14
      // Predicated region
      $region45: #{_mlp_pallas.1} parent=5 // pred_check
        %p420 = pneg %p419
      $region46: #{_mlp_pallas.1} parent=5 // pred_check_branch
        %422 = sbr.rel (%p420) target = $region48
      $region47: #{_mlp_pallas.1} parent=5 // pred_region
        %s423 = ssub.s32 %s14, 2
        // Predicated region
        $region49: #{_mlp_pallas.1} parent=47 // pred_check
          %p424 = pneg %p153
        $region50: #{_mlp_pallas.1} parent=47 // pred_check_branch
          %426 = sbr.rel (%p424) target = $region52
        $region51: #{_mlp_pallas.1} parent=47 // pred_region
          %s427 = sand.u32 %s138, 1
          %s428 = scalar_lea.sflag [#allocation3], %s427
          %s429 = sand.u32 %s138, 1
          %s430 = smul.addr %s429, 8
          %s431 = scalar_lea.vmem [#allocation2], %s430
          %432 = dma.done %s428, 128
        $region52: #{_mlp_pallas.1} parent=47 // pred_fallthru
          _
      $region48: #{_mlp_pallas.1} parent=5 // pred_fallthru
        _
    $region6: #{_mlp_pallas.1} parent=1 // loop_footer
      %s18 = sadd.s32 1, %s14
    $region7: #{_mlp_pallas.1} parent=1 // loop_footer_branch
      %13 = sbr.rel target = $region3
    $region8: #{_mlp_pallas.1} parent=1 // loop_exit
      _
    %433 = vsyncpa [#allocation3], 1
    %s434 = scalar_lea.sflag [#allocation3], 1
    %435 = vsyncpa %s434, 1

</llo_original>
